<compile_context>
chip_gen: v5e
topology: v5e:2x2
jax: 0.10.0
libtpu: 0.0.40
codegen_flags: <defaults>
</compile_context>

<pallas_src>
import functools
import math

import jax
import jax.numpy as jnp
from jax import lax
from jax.experimental import pallas as pl
from jax.experimental.pallas import tpu as pltpu


def _downsample_s2d_kernel(x_main_ref, x_halo_ref, w_ref, b_ref, o_ref, *,
                           tho, Wo, C, Cout):
    """Stride-2 3x3 conv on one row tile, expressed as a single big-K MXU matmul.

    x_main_ref : (1, tho, Wo+1, 4C)  s2d rows [r*tho, (r+1)*tho) of the padded image
    x_halo_ref : (1, 1,  Wo+1, 4C)   s2d row  (r+1)*tho  (one-row halo)
    w_ref      : (9C, Cout)          weights, rows ordered to match the im2col below
    b_ref      : (1, Cout)           bias (f32)
    o_ref      : (1, tho, Wo, Cout)  output tile
    """
    T = x_main_ref[0]                              # "top" block-rows   xsp[oy]
    hal = x_halo_ref[0]                            # (1, Wo+1, 4C)
    if tho > 1:
        B = jnp.concatenate([T[1:], hal], axis=0)  # "bottom" rows      xsp[oy+1]
    else:
        B = hal
    TL, TR = T[:, :Wo, :], T[:, 1:, :]             # left / right block-cols
    BL, BR = B[:, :Wo, :], B[:, 1:, :]

    # Exact (tho, Wo, 9C) im2col: channel sub-ranges pick the (ph, pw) sub-pixels of
    # each 2x2 block that correspond to the 9 conv taps (weight rows packed to match
    # in the wrapper).  Only 5 pieces: adjacent taps share contiguous channels.
    patches = jnp.concatenate(
        [TL[..., 3 * C:4 * C],                     # tap (0,0)
         TR[..., 2 * C:4 * C],                     # taps (0,1), (0,2)
         BL[..., 1 * C:2 * C],                     # tap (1,0)
         BL[..., 3 * C:4 * C],                     # tap (2,0)
         BR],                                      # taps (1,1), (1,2), (2,1), (2,2)
        axis=-1)

    acc = jnp.dot(patches.reshape(tho * Wo, 9 * C), w_ref[...],
                  preferred_element_type=jnp.float32)      # one K=9C contraction
    acc = acc + b_ref[...]                                  # single epilogue pass
    o_ref[...] = acc.reshape(1, tho, Wo, Cout).astype(o_ref.dtype)


def downsample(x_nchw, w_oihw, bias, *, row_tile=None, compute_dtype=jnp.bfloat16):
    """Pallas equivalent of DownSample.forward(x, temb)  (temb is unused)."""
    N, Cin, H, W = x_nchw.shape
    Cout, Cin2, KH, KW = w_oihw.shape
    assert (Cin2, KH, KW) == (Cin, 3, 3) and Cout == Cin
    assert H % 2 == 0 and W % 2 == 0, "DDPM UNet resolutions are even"
    # TODO(synk): odd H/W (Ho = ceil(H/2)) would need an extra zero block-row/col
    # on the bottom/right; not needed for power-of-two diffusion resolutions.
    Ho, Wo = H // 2, W // 2
    C4 = 4 * Cin

    # ---- spatial row tiling: keeps per-step VMEM bounded at any resolution -------
    if row_tile is None:
        budget = 2 * 1024 * 1024                   # ~2 MiB activation tile target
        per_row = (Wo + 1) * C4 * jnp.dtype(compute_dtype).itemsize
        row_tile = max(1, budget // per_row)
    tho = int(min(row_tile, Ho))
    while Ho % tho:                                # largest divisor of Ho <= row_tile
        tho -= 1
    n_row_tiles = Ho // tho

    # ---- the single layout copy: NCHW -> 2x2 space-to-depth + pad + bf16 ---------
    # TODO(synk): in an end-to-end NHWC UNet this transpose (and the inverse one on
    # the output) disappears; it is only needed because the reference module is NCHW.
    xs = x_nchw.astype(compute_dtype).reshape(N, Cin, Ho, 2, Wo, 2)
    xs = jnp.transpose(xs, (0, 2, 4, 3, 5, 1)).reshape(N, Ho, Wo, C4)
    xsp = jnp.pad(xs, ((0, 0), (1, 0), (1, 0), (0, 0)))  # 'same' pad = 1 blk row/col

    # ---- weights: OIHW -> (9*Cin, Cout), rows in the kernel's im2col order --------
    w_hwio = jnp.transpose(w_oihw, (2, 3, 1, 0)).astype(compute_dtype)  # (3,3,Ci,Co)
    wmat = jnp.concatenate(
        [w_hwio[0, 0], w_hwio[0, 1], w_hwio[0, 2],
         w_hwio[1, 0], w_hwio[2, 0],
         w_hwio[1, 1], w_hwio[1, 2], w_hwio[2, 1], w_hwio[2, 2]],
        axis=0)                                                          # (9C, Cout)
    b2 = bias.astype(jnp.float32).reshape(1, Cout)

    kernel = functools.partial(_downsample_s2d_kernel,
                               tho=tho, Wo=Wo, C=Cin, Cout=Cout)

    out_nhwc = pl.pallas_call(
        kernel,
        out_shape=jax.ShapeDtypeStruct((N, Ho, Wo, Cout), x_nchw.dtype),
        grid_spec=pltpu.PrefetchScalarGridSpec(
            num_scalar_prefetch=0,
            grid=(N, n_row_tiles),
            in_specs=[
                # main row tile of the padded space-to-depth image
                pl.BlockSpec((1, tho, Wo + 1, C4), lambda n, r: (n, r, 0, 0)),
                # one-row halo (same array, second spec -> no overlapping blocks)
                pl.BlockSpec((1, 1, Wo + 1, C4),
                             lambda n, r: (n, (r + 1) * tho, 0, 0)),
                # grid-invariant weights / bias
                pl.BlockSpec((9 * Cin, Cout), lambda n, r: (0, 0)),
                pl.BlockSpec((1, Cout), lambda n, r: (0, 0)),
            ],
            out_specs=pl.BlockSpec((1, tho, Wo, Cout), lambda n, r: (n, r, 0, 0)),
        ),
        compiler_params=pltpu.CompilerParams(
            dimension_semantics=("parallel", "parallel"),
            vmem_limit_bytes=64 * 1024 * 1024,
        ),
    )(xsp, xsp, wmat, b2)

    return jnp.transpose(out_nhwc, (0, 3, 1, 2))   # back to NCHW (interface)


if __name__ == "__main__":
    key = jax.random.PRNGKey(0)
    k_x, k_w, k_b, k_t = jax.random.split(key, 4)

    N, C, H, W = 2, 4, 16, 16
    x = jax.random.normal(k_x, (N, C, H, W), dtype=jnp.float32)
    temb = jax.random.normal(k_t, (N, 32), dtype=jnp.float32)  # unused by forward()

    fan_in = C * 3 * 3
    bound = 1.0 / math.sqrt(fan_in)
    w = jax.random.uniform(k_w, (C, C, 3, 3), jnp.float32, -bound, bound)
    b = jax.random.uniform(k_b, (C,), jnp.float32, -bound, bound)

    # Multi-row-tile path (grid = (N, 2)).
    out = jax.block_until_ready(downsample(x, w, b, row_tile=4))
    assert out.shape == (N, C, H // 2, W // 2)
    # Single-tile path (auto row tile) should agree with the tiled path.
    out2 = jax.block_until_ready(downsample(x, w, b))
    assert jnp.allclose(out, out2, atol=1e-5, rtol=1e-5)

    # Reference 1: exact semantics of the kernel (bf16 operands, f32 accumulation).
    xb = x.astype(jnp.bfloat16).astype(jnp.float32)
    wb = w.astype(jnp.bfloat16).astype(jnp.float32)
    ref_bf16 = lax.conv_general_dilated(
        xb, wb, window_strides=(2, 2), padding=((1, 1), (1, 1)),
        dimension_numbers=("NCHW", "OIHW", "NCHW"),
        precision=lax.Precision.HIGHEST,
    ) + b.reshape(1, C, 1, 1)
    assert jnp.allclose(out, ref_bf16, atol=1e-4, rtol=1e-4), (
        float(jnp.max(jnp.abs(out - ref_bf16))))

    # Reference 2: the f32 PyTorch module output (bf16-matmul tolerance).
    ref_f32 = lax.conv_general_dilated(
        x, w, window_strides=(2, 2), padding=((1, 1), (1, 1)),
        dimension_numbers=("NCHW", "OIHW", "NCHW"),
        precision=lax.Precision.HIGHEST,
    ) + b.reshape(1, C, 1, 1)
    assert jnp.allclose(out, ref_f32, atol=5e-2, rtol=5e-2)

    print("KERNEL_OK")
</pallas_src>

<mosaic_0001>
module attributes {stable_mosaic.version = 11 : i64} {
  func.func @_downsample_s2d_kernel(%arg0: i32, %arg1: i32, %arg2: memref<1x4x9x16xbf16, #tpu.memory_space<vmem>>, %arg3: memref<1x1x9x16xbf16, #tpu.memory_space<vmem>>, %arg4: memref<36x4xbf16, #tpu.memory_space<vmem>>, %arg5: memref<1x4xf32, #tpu.memory_space<vmem>>, %arg6: memref<1x4x8x4xf32, #tpu.memory_space<vmem>>) attributes {dimension_semantics = [#tpu.dimension_semantics<parallel>, #tpu.dimension_semantics<parallel>], iteration_bounds = array<i64: 2, 2>, scalar_prefetch = 0 : i64, scratch_operands = 0 : i64, tpu.core_type = #tpu.core_type<tc>, window_params = [{transform_indices = @transform_0, window_bounds = array<i64: 1, 4, 9, 16>}, {transform_indices = @transform_1, window_bounds = array<i64: 1, 1, 9, 16>}, {pipeline_mode = #tpu.pipeline_mode<synchronous>, transform_indices = @transform_2, window_bounds = array<i64: 36, 4>}, {pipeline_mode = #tpu.pipeline_mode<synchronous>, transform_indices = @transform_3, window_bounds = array<i64: 1, 4>}, {transform_indices = @transform_4, window_bounds = array<i64: 1, 4, 8, 4>}]} {
    %c0 = arith.constant 0 : index
    %c0_0 = arith.constant 0 : index
    %c0_1 = arith.constant 0 : index
    %c0_2 = arith.constant 0 : index
    %0 = vector.load %arg2[%c0, %c0_0, %c0_1, %c0_2] : memref<1x4x9x16xbf16, #tpu.memory_space<vmem>>, vector<1x4x9x16xbf16>
    %1 = vector.shape_cast %0 : vector<1x4x9x16xbf16> to vector<4x9x16xbf16>
    %c0_3 = arith.constant 0 : index
    %c0_4 = arith.constant 0 : index
    %c0_5 = arith.constant 0 : index
    %c0_6 = arith.constant 0 : index
    %2 = vector.load %arg3[%c0_3, %c0_4, %c0_5, %c0_6] : memref<1x1x9x16xbf16, #tpu.memory_space<vmem>>, vector<1x1x9x16xbf16>
    %3 = vector.shape_cast %2 : vector<1x1x9x16xbf16> to vector<1x9x16xbf16>
    %4 = vector.extract_strided_slice %1 {offsets = [1, 0, 0], sizes = [3, 9, 16], strides = [1, 1, 1]} : vector<4x9x16xbf16> to vector<3x9x16xbf16>
    %5 = tpu.concatenate %4, %3 in 0 : vector<3x9x16xbf16>, vector<1x9x16xbf16> -> vector<4x9x16xbf16>
    %6 = vector.extract_strided_slice %1 {offsets = [0, 0, 0], sizes = [4, 8, 16], strides = [1, 1, 1]} : vector<4x9x16xbf16> to vector<4x8x16xbf16>
    %7 = vector.extract_strided_slice %1 {offsets = [0, 1, 0], sizes = [4, 8, 16], strides = [1, 1, 1]} : vector<4x9x16xbf16> to vector<4x8x16xbf16>
    %8 = vector.extract_strided_slice %5 {offsets = [0, 0, 0], sizes = [4, 8, 16], strides = [1, 1, 1]} : vector<4x9x16xbf16> to vector<4x8x16xbf16>
    %9 = vector.extract_strided_slice %5 {offsets = [0, 1, 0], sizes = [4, 8, 16], strides = [1, 1, 1]} : vector<4x9x16xbf16> to vector<4x8x16xbf16>
    %10 = vector.extract_strided_slice %6 {offsets = [0, 0, 12], sizes = [4, 8, 4], strides = [1, 1, 1]} : vector<4x8x16xbf16> to vector<4x8x4xbf16>
    %11 = vector.extract_strided_slice %7 {offsets = [0, 0, 8], sizes = [4, 8, 8], strides = [1, 1, 1]} : vector<4x8x16xbf16> to vector<4x8x8xbf16>
    %12 = vector.extract_strided_slice %8 {offsets = [0, 0, 4], sizes = [4, 8, 4], strides = [1, 1, 1]} : vector<4x8x16xbf16> to vector<4x8x4xbf16>
    %13 = vector.extract_strided_slice %8 {offsets = [0, 0, 12], sizes = [4, 8, 4], strides = [1, 1, 1]} : vector<4x8x16xbf16> to vector<4x8x4xbf16>
    %14 = tpu.concatenate %10, %11, %12, %13, %9 in 2 : vector<4x8x4xbf16>, vector<4x8x8xbf16>, vector<4x8x4xbf16>, vector<4x8x4xbf16>, vector<4x8x16xbf16> -> vector<4x8x36xbf16>
    %15 = vector.shape_cast %14 : vector<4x8x36xbf16> to vector<32x36xbf16>
    %c0_7 = arith.constant 0 : index
    %c0_8 = arith.constant 0 : index
    %16 = vector.load %arg4[%c0_7, %c0_8] : memref<36x4xbf16, #tpu.memory_space<vmem>>, vector<36x4xbf16>
    %cst = arith.constant dense<0.000000e+00> : vector<32x4xf32>
    %17 = tpu.matmul %15, %16, %cst {dimension_numbers = #tpu.dot_dimension_numbers<[1], [0], [0], [1], [0, 0, 1, 1], [], []>} : vector<32x36xbf16>, vector<36x4xbf16>, vector<32x4xf32> -> vector<32x4xf32>
    %c0_9 = arith.constant 0 : index
    %c0_10 = arith.constant 0 : index
    %18 = vector.load %arg5[%c0_9, %c0_10] : memref<1x4xf32, #tpu.memory_space<vmem>>, vector<1x4xf32>
    %19 = vector.broadcast %18 : vector<1x4xf32> to vector<32x4xf32>
    %20 = arith.addf %17, %19 : vector<32x4xf32>
    %21 = vector.shape_cast %20 : vector<32x4xf32> to vector<1x4x8x4xf32>
    %c0_11 = arith.constant 0 : index
    %c0_12 = arith.constant 0 : index
    %c0_13 = arith.constant 0 : index
    %c0_14 = arith.constant 0 : index
    %22 = vector.load %arg6[%c0_11, %c0_12, %c0_13, %c0_14] : memref<1x4x8x4xf32, #tpu.memory_space<vmem>>, vector<1x4x8x4xf32>
    tpu.vector_store %arg6[%c0_11, %c0_12, %c0_13, %c0_14], %21 {strides = array<i32>} : memref<1x4x8x4xf32, #tpu.memory_space<vmem>>, vector<1x4x8x4xf32>,
    return
  }
  func.func @transform_0(%arg0: i32, %arg1: i32) -> (i32, i32, i32, i32) {
    %c0_i32 = arith.constant 0 : i32
    %c0_i32_0 = arith.constant 0 : i32
    %c0_i32_1 = arith.constant 0 : i32
    return %arg0, %arg1, %c0_i32, %c0_i32_0 : i32, i32, i32, i32
  }
  func.func @transform_1(%arg0: i32, %arg1: i32) -> (i32, i32, i32, i32) {
    %c1_i32 = arith.constant 1 : i32
    %0 = arith.addi %arg1, %c1_i32 : i32
    %c4_i32 = arith.constant 4 : i32
    %1 = arith.muli %0, %c4_i32 : i32
    %c0_i32 = arith.constant 0 : i32
    %c0_i32_0 = arith.constant 0 : i32
    %c0_i32_1 = arith.constant 0 : i32
    return %arg0, %1, %c0_i32, %c0_i32_0 : i32, i32, i32, i32
  }
  func.func @transform_2(%arg0: i32, %arg1: i32) -> (i32, i32) {
    %c0_i32 = arith.constant 0 : i32
    %c0_i32_0 = arith.constant 0 : i32
    %c0_i32_1 = arith.constant 0 : i32
    return %c0_i32, %c0_i32_0 : i32, i32
  }
  func.func @transform_3(%arg0: i32, %arg1: i32) -> (i32, i32) {
    %c0_i32 = arith.constant 0 : i32
    %c0_i32_0 = arith.constant 0 : i32
    %c0_i32_1 = arith.constant 0 : i32
    return %c0_i32, %c0_i32_0 : i32, i32
  }
  func.func @transform_4(%arg0: i32, %arg1: i32) -> (i32, i32, i32, i32) {
    %c0_i32 = arith.constant 0 : i32
    %c0_i32_0 = arith.constant 0 : i32
    %c0_i32_1 = arith.constant 0 : i32
    return %arg0, %arg1, %c0_i32, %c0_i32_0 : i32, i32, i32, i32
  }
}

</mosaic_0001>

<llo_original>
// kernel: tpu_custom_call.1
$region0: #{tpu_custom_call.1}
  #allocation0 [shape = 'u32[]', space=smem, size = 0x4, offset = 0x4, fixed_abs, tag = 'smem constant byte address 0x4 - core index']
  #allocation1 [shape = 'u32[72,128]{1,0:T(1,128)}', space=vmem, size = 0x9000, scoped, tag = 'internal scratch']
  %s0 = inlined_call_operand.vmem [shape: bf16[2,9,9,16], index: 0, kind: input, shape index: {}]
  %s1 = inlined_call_operand.vmem [shape: bf16[2,9,9,16], index: 1, kind: input, shape index: {}]
  %s2 = inlined_call_operand.vmem [shape: bf16[36,4], index: 2, kind: input, shape index: {}]
  %s3 = inlined_call_operand.vmem [shape: f32[1,4], index: 3, kind: input, shape index: {}]
  %s4 = inlined_call_operand.vmem [shape: f32[2,8,8,4], index: 4, kind: output, shape index: {}]
  %s5 = sld [smem:[#allocation0]]
  $region49: #{tpu_custom_call.1} parent=0
    _
  %s7 = ssub.s32 1, %s5
  %s8 = scalar_select 0, %s7, %s5
  loop: start=0, step=1, limit=6
  $region2: #{tpu_custom_call.1} parent=0 // loop_pre_header
    _
  $region3: #{tpu_custom_call.1} parent=0 // loop_header
    %s10 = sphi 0, %s14
    %p11 = scmp.ge.s32.totalorder %s10, 6
    %s17 = sphi 0, %s29
    %s18 = sphi 0, %s25
    %s19 = sphi 0, %s17
    %s20 = sphi 0, %s18
    %s21 = sphi 0, %s19
    %s22 = sphi 0, %s20
    %s34 = sphi 0, %s36
    %s37 = sphi 0, %s34
    %s38 = sphi 0, %s37
    %s54 = sphi 0, %s38
    %s66 = sphi 0, %s68
    %s69 = sphi 0, %s66
    %s70 = sphi 0, %s69
    %s86 = sphi 0, %s70
    %s90 = sphi 0, %s90
    %s92 = sphi 0, %s90
    %s93 = sphi 0, %s92
    %s107 = sphi 0, %s93
    %s111 = sphi 0, %s111
    %s113 = sphi 0, %s111
    %s114 = sphi 0, %s113
    %s128 = sphi 0, %s114
    %s136 = sphi 0, %s138
    %s139 = sphi 0, %s136
    %s140 = sphi 0, %s139
    %s156 = sphi 0, %s140
  $region4: #{tpu_custom_call.1} parent=0 // loop_header_branch
    %13 = sbr.rel (%p11) target = $region8
  $region5: #{tpu_custom_call.1} parent=0 // loop_body
    %s15 = ssub.s32 %s10, 1
    %s16 = ssub.s32 %s10, 2
    %s23 = sadd.s32 1, %s18
    %p24 = scmp.ge.s32.totalorder %s23, 2
    %s25 = scalar_select %p24, 0, %s23
    %s26 = sadd.s32 1, %s17
    %s27 = scalar_select %p24, %s26, %s17
    %p28 = scmp.ge.s32.totalorder %s27, 2
    %s29 = scalar_select %p28, 0, %s27
    %s30 = ssub.s32 %s17, %s29
    %s31 = ssub.s32 %s18, %s25
    %s32 = sor.u32 %s30, %s31
    %p33 = scmp.eq.s32.totalorder %s32, 0
    %s35 = sadd.s32 %s34, 1
    %s36 = scalar_select %p33, %s34, %s35
    %p39 = pneg %p33
    %p40 = scmp.eq.s32.totalorder %s10, 3
    %p41 = por %p39, %p40
    %p42 = scmp.ne.s32.totalorder %s34, %s37
    %p43 = scmp.eq.s32.totalorder %s10, 0
    %p44 = por %p42, %p43
    %p45 = scmp.ne.s32.totalorder %s34, %s37
    %p46 = scmp.eq.s32.totalorder %s15, 3
    %p47 = por %p45, %p46
    %p48 = scmp.ne.s32.totalorder %s37, %s38
    %p49 = scmp.eq.s32.totalorder %s15, 0
    %p50 = por %p48, %p49
    %p51 = scmp.ne.s32.totalorder %s37, %s38
    %p52 = scmp.eq.s32.totalorder %s16, 3
    %p53 = por %p51, %p52
    %p55 = scmp.ne.s32.totalorder %s38, %s54
    %p56 = scmp.eq.s32.totalorder %s16, 0
    %p57 = por %p55, %p56
    %s58 = sadd.s32 %s18, 1
    %s59 = smul.u32 %s58, 4
    %s60 = sadd.s32 %s25, 1
    %s61 = smul.u32 %s60, 4
    %s62 = ssub.s32 %s17, %s29
    %s63 = ssub.s32 %s59, %s61
    %s64 = sor.u32 %s62, %s63
    %p65 = scmp.eq.s32.totalorder %s64, 0
    %s67 = sadd.s32 %s66, 1
    %s68 = scalar_select %p65, %s66, %s67
    %p71 = pneg %p65
    %p72 = scmp.eq.s32.totalorder %s10, 3
    %p73 = por %p71, %p72
    %p74 = scmp.ne.s32.totalorder %s66, %s69
    %p75 = scmp.eq.s32.totalorder %s10, 0
    %p76 = por %p74, %p75
    %p77 = scmp.ne.s32.totalorder %s66, %s69
    %p78 = scmp.eq.s32.totalorder %s15, 3
    %p79 = por %p77, %p78
    %p80 = scmp.ne.s32.totalorder %s69, %s70
    %p81 = scmp.eq.s32.totalorder %s15, 0
    %p82 = por %p80, %p81
    %p83 = scmp.ne.s32.totalorder %s69, %s70
    %p84 = scmp.eq.s32.totalorder %s16, 3
    %p85 = por %p83, %p84
    %p87 = scmp.ne.s32.totalorder %s70, %s86
    %p88 = scmp.eq.s32.totalorder %s16, 0
    %p89 = por %p87, %p88
    %s91 = sadd.s32 %s90, 1
    %p94 = scmp.eq.s32.totalorder %s10, 3
    %p95 = scmp.ne.s32.totalorder %s90, %s92
    %p96 = scmp.eq.s32.totalorder %s10, 0
    %p97 = por %p95, %p96
    %p98 = scmp.ne.s32.totalorder %s90, %s92
    %p99 = scmp.eq.s32.totalorder %s15, 3
    %p100 = por %p98, %p99
    %p101 = scmp.ne.s32.totalorder %s92, %s93
    %p102 = scmp.eq.s32.totalorder %s15, 0
    %p103 = por %p101, %p102
    %p104 = scmp.ne.s32.totalorder %s92, %s93
    %p105 = scmp.eq.s32.totalorder %s16, 3
    %p106 = por %p104, %p105
    %p108 = scmp.ne.s32.totalorder %s93, %s107
    %p109 = scmp.eq.s32.totalorder %s16, 0
    %p110 = por %p108, %p109
    %s112 = sadd.s32 %s111, 1
    %p115 = scmp.eq.s32.totalorder %s10, 3
    %p116 = scmp.ne.s32.totalorder %s111, %s113
    %p117 = scmp.eq.s32.totalorder %s10, 0
    %p118 = por %p116, %p117
    %p119 = scmp.ne.s32.totalorder %s111, %s113
    %p120 = scmp.eq.s32.totalorder %s15, 3
    %p121 = por %p119, %p120
    %p122 = scmp.ne.s32.totalorder %s113, %s114
    %p123 = scmp.eq.s32.totalorder %s15, 0
    %p124 = por %p122, %p123
    %p125 = scmp.ne.s32.totalorder %s113, %s114
    %p126 = scmp.eq.s32.totalorder %s16, 3
    %p127 = por %p125, %p126
    %p129 = scmp.ne.s32.totalorder %s114, %s128
    %p130 = scmp.eq.s32.totalorder %s16, 0
    %p131 = por %p129, %p130
    %s132 = ssub.s32 %s17, %s29
    %s133 = ssub.s32 %s18, %s25
    %s134 = sor.u32 %s132, %s133
    %p135 = scmp.eq.s32.totalorder %s134, 0
    %s137 = sadd.s32 %s136, 1
    %s138 = scalar_select %p135, %s136, %s137
    %p141 = pneg %p135
    %p142 = scmp.eq.s32.totalorder %s10, 3
    %p143 = por %p141, %p142
    %p144 = scmp.ne.s32.totalorder %s136, %s139
    %p145 = scmp.eq.s32.totalorder %s10, 0
    %p146 = por %p144, %p145
    %p147 = scmp.ne.s32.totalorder %s136, %s139
    %p148 = scmp.eq.s32.totalorder %s15, 3
    %p149 = por %p147, %p148
    %p150 = scmp.ne.s32.totalorder %s139, %s140
    %p151 = scmp.eq.s32.totalorder %s15, 0
    %p152 = por %p150, %p151
    %p153 = scmp.ne.s32.totalorder %s139, %s140
    %p154 = scmp.eq.s32.totalorder %s16, 3
    %p155 = por %p153, %p154
    %p157 = scmp.ne.s32.totalorder %s140, %s156
    %p158 = scmp.eq.s32.totalorder %s16, 0
    %p159 = por %p157, %p158
    %p160 = scmp.le.s32.totalorder 1, %s10
    %p161 = scmp.lt.s32.totalorder %s10, 5
    %p162 = pnand %p160, %p161
    %p163 = pneg %p162
    // Predicated region
    $region9: #{tpu_custom_call.1} parent=5 // pred_check
      _
    $region10: #{tpu_custom_call.1} parent=5 // pred_check_branch
      %165 = sbr.rel (%p162) target = $region12
    $region11: #{tpu_custom_call.1} parent=5 // pred_region
      %s166 = ssub.s32 %s10, 1
      // Predicated region
      $region13: #{tpu_custom_call.1} parent=11 // pred_check
        %p167 = pneg %p103
      $region14: #{tpu_custom_call.1} parent=11 // pred_check_branch
        %169 = sbr.rel (%p167) target = $region16
      $region15: #{tpu_custom_call.1} parent=11 // pred_region
        _
      $region16: #{tpu_custom_call.1} parent=11 // pred_fallthru
        _
      // Predicated region
      $region17: #{tpu_custom_call.1} parent=11 // pred_check
        %p170 = pneg %p124
      $region18: #{tpu_custom_call.1} parent=11 // pred_check_branch
        %172 = sbr.rel (%p170) target = $region20
      $region19: #{tpu_custom_call.1} parent=11 // pred_region
        _
      $region20: #{tpu_custom_call.1} parent=11 // pred_fallthru
        _
    $region12: #{tpu_custom_call.1} parent=5 // pred_fallthru
      _
    %p173 = scmp.lt.s32.totalorder %s10, 4
    // Predicated region
    $region21: #{tpu_custom_call.1} parent=5 // pred_check
      %p174 = pneg %p173
    $region22: #{tpu_custom_call.1} parent=5 // pred_check_branch
      %176 = sbr.rel (%p174) target = $region24
    $region23: #{tpu_custom_call.1} parent=5 // pred_region
      // Predicated region
      $region25: #{tpu_custom_call.1} parent=23 // pred_check
        %p177 = pneg %p44
      $region26: #{tpu_custom_call.1} parent=23 // pred_check_branch
        %179 = sbr.rel (%p177) target = $region28
      $region27: #{tpu_custom_call.1} parent=23 // pred_region
        %s180 = smul.u32 4, %s18
        %s181 = ssub.s32 9, %s180
        %p182 = scmp.lt.s32.totalorder %s181, 4
        %s183 = scalar_select %p182, %s181, 4
        %s184 = smul.u32 4, %s183
        %s185 = smul.u32 %s184, 2
        %p186 = scmp.lt.s32.totalorder %s17, 1
        %s187 = scalar_select %p186, %s17, 1
        %p188 = scmp.lt.s32.totalorder %s180, 8
        %s189 = scalar_select %p188, %s180, 8
        %s190 = smul.addr %s189, 2
        %s191 = smul.addr %s187, 18
        %s192 = sadd.s32 %s190, %s191
        %s193 = smul.addr %s192, 4
        %s194 = scalar_lea.vmem %s0, %s193
        %s195 = smul.u32 4, %s18
        %s196 = ssub.s32 9, %s195
        %p197 = scmp.lt.s32.totalorder %s196, 4
        %s198 = scalar_select %p197, %s196, 4
        %s199 = smul.u32 4, %s198
        %s200 = smul.u32 %s199, 2
      $region28: #{tpu_custom_call.1} parent=23 // pred_fallthru
        _
      // Predicated region
      $region29: #{tpu_custom_call.1} parent=23 // pred_check
        %p201 = pneg %p76
      $region30: #{tpu_custom_call.1} parent=23 // pred_check_branch
        %203 = sbr.rel (%p201) target = $region32
      $region31: #{tpu_custom_call.1} parent=23 // pred_region
        %s204 = sadd.s32 %s18, 1
        %s205 = smul.u32 %s204, 4
        %p206 = scmp.lt.s32.totalorder %s17, 1
        %s207 = scalar_select %p206, %s17, 1
        %p208 = scmp.lt.s32.totalorder %s205, 8
        %s209 = scalar_select %p208, %s205, 8
        %s210 = smul.addr %s209, 2
        %s211 = smul.addr %s207, 18
        %s212 = sadd.s32 %s210, %s211
        %s213 = smul.addr %s212, 4
        %s214 = scalar_lea.vmem %s1, %s213
        %s215 = sadd.s32 %s18, 1
        %s216 = smul.u32 %s215, 4
      $region32: #{tpu_custom_call.1} parent=23 // pred_fallthru
        _
    $region24: #{tpu_custom_call.1} parent=5 // pred_fallthru
      _
    %p217 = scmp.le.s32.totalorder 1, %s10
    %p218 = scmp.lt.s32.totalorder %s10, 5
    %p219 = pnand %p217, %p218
    %p220 = pneg %p219
    // Predicated region
    $region33: #{tpu_custom_call.1} parent=5 // pred_check
      _
    $region34: #{tpu_custom_call.1} parent=5 // pred_check_branch
      %222 = sbr.rel (%p219) target = $region36
    $region35: #{tpu_custom_call.1} parent=5 // pred_region
      %s223 = ssub.s32 %s10, 1
      %s224 = smul.u32 4, %s20
      %s225 = ssub.s32 9, %s224
      %p226 = scmp.lt.s32.totalorder %s225, 4
      %s227 = scalar_select %p226, %s225, 4
      %s228 = smul.u32 4, %s227
      %s229 = smul.u32 %s228, 2
      %p230 = scmp.lt.s32.totalorder %s19, 1
      %s231 = scalar_select %p230, %s19, 1
      %p232 = scmp.lt.s32.totalorder %s224, 8
      %s233 = scalar_select %p232, %s224, 8
      %s234 = smul.addr %s233, 2
      %s235 = smul.addr %s231, 18
      %s236 = sadd.s32 %s234, %s235
      %s237 = smul.addr %s236, 4
      %s238 = scalar_lea.vmem %s0, %s237
      %p239 = pneg %p50
      %p240 = pneg %p47
      %s241 = sadd.s32 %s20, 1
      %s242 = smul.u32 %s241, 4
      %p243 = scmp.lt.s32.totalorder %s19, 1
      %s244 = scalar_select %p243, %s19, 1
      %p245 = scmp.lt.s32.totalorder %s242, 8
      %s246 = scalar_select %p245, %s242, 8
      %s247 = smul.addr %s246, 2
      %s248 = smul.addr %s244, 18
      %s249 = sadd.s32 %s247, %s248
      %s250 = smul.addr %s249, 4
      %s251 = scalar_lea.vmem %s1, %s250
      %p252 = pneg %p82
      %p253 = pneg %p79
      %p254 = pneg %p103
      %p255 = pneg %p100
      %p256 = pneg %p124
      %p257 = pneg %p121
      %p258 = pneg %p152
      %p259 = pneg %p149
      %s260 = smul.u32 4, %s20
      %p261 = scmp.lt.s32.totalorder %s19, 1
      %s262 = scalar_select %p261, %s19, 1
      %p263 = scmp.lt.s32.totalorder %s260, 7
      %s264 = scalar_select %p263, %s260, 7
      %s265 = smul.addr %s262, 8
      %s266 = sadd.s32 %s264, %s265
      %s267 = smul.addr %s266, 8
      %s268 = scalar_lea.vmem %s4, %s267
      %s269 = smul.u32 4, %s20
      %s270 = ssub.s32 9, %s269
      %p271 = scmp.lt.s32.totalorder %s270, 4
      %s272 = scalar_select %p271, %s270, 4
      %s273 = smul.u32 4, %s272
      %s274 = smul.u32 %s273, 2
      %p275 = scmp.lt.s32.totalorder %s19, 1
      %s276 = scalar_select %p275, %s19, 1
      %p277 = scmp.lt.s32.totalorder %s269, 8
      %s278 = scalar_select %p277, %s269, 8
      %s279 = smul.addr %s278, 2
      %s280 = smul.addr %s276, 18
      %s281 = sadd.s32 %s279, %s280
      %s282 = smul.addr %s281, 4
      %s283 = scalar_lea.vmem %s0, %s282
      %s284 = smul.u32 4, %s20
      %s285 = ssub.s32 9, %s284
      %p286 = scmp.lt.s32.totalorder %s285, 4
      %s287 = scalar_select %p286, %s285, 4
      %s288 = smul.u32 4, %s287
      %s289 = smul.u32 %s288, 2
      %s290 = sadd.s32 %s20, 1
      %s291 = smul.u32 %s290, 4
      %p292 = scmp.lt.s32.totalorder %s19, 1
      %s293 = scalar_select %p292, %s19, 1
      %p294 = scmp.lt.s32.totalorder %s291, 8
      %s295 = scalar_select %p294, %s291, 8
      %s296 = smul.addr %s295, 2
      %s297 = smul.addr %s293, 18
      %s298 = sadd.s32 %s296, %s297
      %s299 = smul.addr %s298, 4
      %s300 = scalar_lea.vmem %s1, %s299
      %s301 = sadd.s32 %s20, 1
      %s302 = smul.u32 %s301, 4
      %s303 = smul.u32 4, %s20
      %p304 = scmp.lt.s32.totalorder %s19, 1
      %s305 = scalar_select %p304, %s19, 1
      %p306 = scmp.lt.s32.totalorder %s303, 7
      %s307 = scalar_select %p306, %s303, 7
      %s308 = smul.addr %s305, 8
      %s309 = sadd.s32 %s307, %s308
      %s310 = smul.addr %s309, 8
      %s311 = scalar_lea.vmem %s4, %s310
      %s312 = smul.u32 4, %s20
      %v314 = vld [vmem:[%s283] sm:$0xf]
      %v315 = vld [vmem:[%s283 + $0x4] sm:$0x1]
      %v316 = vld [vmem:[%s283 + $0x8] sm:$0xf]
      %v317 = vld [vmem:[%s283 + $0xc] sm:$0x1]
      %v318 = vld [vmem:[%s283 + $0x10] sm:$0xf]
      %v319 = vld [vmem:[%s283 + $0x14] sm:$0x1]
      %v320 = vld [vmem:[%s283 + $0x18] sm:$0xf]
      %v321 = vld [vmem:[%s283 + $0x1c] sm:$0x1]
      %v322 = vld [vmem:[%s300] sm:$0xf]
      %v323 = vld [vmem:[%s300 + $0x4] sm:$0x1]
      %v328 = vunpack.c.l.b16 %v314
      %v329 = vunpack.c.l.b16 %v316
      %v330 = vunpack.c.l.b16 %v318
      %v331 = vunpack.c.l.b16 %v320
      %v332 = vpack.c.b16 %v328, %v328
      %v333 = vpack.c.b16 %v329, %v329
      %v334 = vpack.c.b16 %v330, %v330
      %v335 = vpack.c.b16 %v331, %v331
      %336 = vrot.lane.b32.xlu0 %v332, 116
      %v337 = vpop.permute.xlu0 %336
      %338 = vrot.lane.b32.xlu0 %v333, 116
      %v339 = vpop.permute.xlu0 %338
      %340 = vrot.lane.b32.xlu0 %v334, 116
      %v341 = vpop.permute.xlu0 %340
      %342 = vrot.lane.b32.xlu0 %v335, 116
      %v343 = vpop.permute.xlu0 %342
      %v348 = vunpack.c.l.b16 %v315
      %v349 = vunpack.c.l.b16 %v317
      %v350 = vunpack.c.l.b16 %v319
      %v351 = vunpack.c.l.b16 %v321
      %v352 = vpack.c.b16 %v348, %v328
      %v353 = vpack.c.b16 %v349, %v329
      %v354 = vpack.c.b16 %v350, %v330
      %v355 = vpack.c.b16 %v351, %v331
      %v357 = vshrl.u32 %v352, 16
      %v359 = vshll.u32 %v352, 16
      %v361 = vrot.slane %v359, 1
      %v362 = vor.u32 %v357, %v361
      %v364 = vshrl.u32 %v353, 16
      %v366 = vshll.u32 %v353, 16
      %v368 = vrot.slane %v366, 1
      %v369 = vor.u32 %v364, %v368
      %v371 = vshrl.u32 %v354, 16
      %v373 = vshll.u32 %v354, 16
      %v375 = vrot.slane %v373, 1
      %v376 = vor.u32 %v371, %v375
      %v378 = vshrl.u32 %v355, 16
      %v380 = vshll.u32 %v355, 16
      %v382 = vrot.slane %v380, 1
      %v383 = vor.u32 %v378, %v382
      %384 = vrot.lane.b32.xlu0 %v362, 124
      %v385 = vpop.permute.xlu0 %384
      %386 = vrot.lane.b32.xlu0 %v369, 124
      %v387 = vpop.permute.xlu0 %386
      %388 = vrot.lane.b32.xlu0 %v376, 124
      %v389 = vpop.permute.xlu0 %388
      %390 = vrot.lane.b32.xlu0 %v383, 124
      %v391 = vpop.permute.xlu0 %390
      %v393 = vunpack.c.l.b16 %v322
      %v394 = vpack.c.b16 %v393, %v393
      %395 = vrot.lane.b32.xlu0 %v333, 8
      %v396 = vpop.permute.xlu0 %395
      %397 = vrot.lane.b32.xlu0 %v334, 8
      %v398 = vpop.permute.xlu0 %397
      %399 = vrot.lane.b32.xlu0 %v335, 8
      %v400 = vpop.permute.xlu0 %399
      %401 = vrot.lane.b32.xlu0 %v394, 8
      %v402 = vpop.permute.xlu0 %401
      %403 = vrot.lane.b32.xlu0 %v333, 4
      %v404 = vpop.permute.xlu0 %403
      %405 = vrot.lane.b32.xlu0 %v334, 4
      %v406 = vpop.permute.xlu0 %405
      %407 = vrot.lane.b32.xlu0 %v335, 4
      %v408 = vpop.permute.xlu0 %407
      %409 = vrot.lane.b32.xlu0 %v394, 4
      %v410 = vpop.permute.xlu0 %409
      %v412 = vunpack.c.l.b16 %v323
      %v413 = vpack.c.b16 %v412, %v393
      %v415 = vshrl.u32 %v413, 16
      %v417 = vshll.u32 %v413, 16
      %v419 = vrot.slane %v417, 1
      %v420 = vor.u32 %v415, %v419
      %421 = vrot.lane.b32.xlu0 %v369, 20
      %v422 = vpop.permute.xlu0 %421
      %423 = vrot.lane.b32.xlu0 %v376, 20
      %v424 = vpop.permute.xlu0 %423
      %425 = vrot.lane.b32.xlu0 %v383, 20
      %v426 = vpop.permute.xlu0 %425
      %427 = vrot.lane.b32.xlu0 %v420, 20
      %v428 = vpop.permute.xlu0 %427
      %vm429 = vcmask 31744
      %v432 = vsel %vm429, %v337, %v385
      %v435 = vsel %vm429, %v339, %v387
      %v438 = vsel %vm429, %v341, %v389
      %v441 = vsel %vm429, %v343, %v391
      %vm442 = vcmask 97280
      %v444 = vsel %vm442, %v432, %v396
      %v446 = vsel %vm442, %v435, %v398
      %v448 = vsel %vm442, %v438, %v400
      %v450 = vsel %vm442, %v441, %v402
      %vm451 = vcmask 130048
      %v453 = vsel %vm451, %v444, %v404
      %v455 = vsel %vm451, %v446, %v406
      %v457 = vsel %vm451, %v448, %v408
      %v459 = vsel %vm451, %v450, %v410
      %vm460 = vcmask 162816
      %v462 = vsel %vm460, %v453, %v422
      %v464 = vsel %vm460, %v455, %v424
      %v466 = vsel %vm460, %v457, %v426
      %v468 = vsel %vm460, %v459, %v428
      %v469 = vld [vmem:[%s2] sm:$0xf]
      %v470 = vld [vmem:[%s2 + $0x4] sm:$0xf]
      %v471 = vld [vmem:[%s2 + $0x8] sm:$0xf]
      %v472 = vld [vmem:[%s2 + $0xc] sm:$0xf]
      %v473 = vld [vmem:[%s2 + $0x10] sm:$0x3]
      %v474 = vld [vmem:[%s3] sm:$0x1]
      %v476 = vperm.slane %v474, 0
      %v482 = vunpack.c.l.b16 %v462
      %v483 = vunpack.c.l.b16 %v464
      %v484 = vunpack.c.l.b16 %v466
      %v485 = vunpack.c.l.b16 %v468
      %v486 = vpack.c.b16 %v483, %v482
      %v487 = vpack.c.b16 %v485, %v484
      %v493 = vunpack.c.l.b16 %v469
      %v494 = vunpack.c.l.b16 %v470
      %v495 = vunpack.c.l.b16 %v471
      %v496 = vunpack.c.l.b16 %v472
      %v497 = vunpack.c.l.b16 %v473
      %v498 = vpack.c.b16 %v494, %v493
      %v499 = vpack.c.b16 %v496, %v495
      %v500 = vpack.c.b16 %v497, %v497
      %vm503 = vcmask 293888
      %v505 = vsel %vm503, %v486, 0
      %v508 = vsel %vm503, %v487, 0
      %vm510 = vcmask 1041408
      %v512 = vsel %vm510, %v500, 0
      %514 = vmatpush.bf16.msra.mxu0 0
      %515 = vmatpush.bf16.msra.mxu0 0
      %516 = vmatpush.bf16.msra.mxu0 0
      %517 = vmatpush.bf16.msra.mxu0 0
      %518 = vmatpush.bf16.msra.mxu0 0
      %519 = vmatpush.bf16.msra.mxu0 %v512
      %520 = vmatpush.bf16.msra.mxu0 %v499
      %521 = vmatpush.bf16.msra.mxu0 %v498
      %522 = vmatmul.bf16.gmra.mxu0 %v505
      %v523 = vpop.f32.mrf.mxu0
      %v524 = vadd.f32 %v476, %v523
      %v525 = vpop.f32.mrf.mxu0
      %v526 = vadd.f32 %v476, %v525
      %527 = vmatmul.bf16.gmra.mxu0 %v508
      %v528 = vpop.f32.mrf.mxu0
      %v529 = vadd.f32 %v476, %v528
      %v530 = vpop.f32.mrf.mxu0
      %v531 = vadd.f32 %v476, %v530
      %532 = vdwg.mxu0
      %533 = vst.msk [vmem:[%s311] sm:$0xff] %vm429, %v524
      %534 = vst.msk [vmem:[%s311 + $0x8] sm:$0xff] %vm429, %v526
      %535 = vst.msk [vmem:[%s311 + $0x10] sm:$0xff] %vm429, %v529
      %536 = vst.msk [vmem:[%s311 + $0x18] sm:$0xff] %vm429, %v531
      %s537 = smul.u32 4, %s20
      %p538 = scmp.lt.s32.totalorder %s19, 1
      %s539 = scalar_select %p538, %s19, 1
      %p540 = scmp.lt.s32.totalorder %s537, 7
      %s541 = scalar_select %p540, %s537, 7
      %s542 = smul.addr %s539, 8
      %s543 = sadd.s32 %s541, %s542
      %s544 = smul.addr %s543, 8
      %s545 = scalar_lea.vmem %s4, %s544
      // Predicated region
      $region37: #{tpu_custom_call.1} parent=35 // pred_check
        %p546 = pneg %p149
      $region38: #{tpu_custom_call.1} parent=35 // pred_check_branch
        %548 = sbr.rel (%p546) target = $region40
      $region39: #{tpu_custom_call.1} parent=35 // pred_region
        %s549 = smul.u32 4, %s20
      $region40: #{tpu_custom_call.1} parent=35 // pred_fallthru
        _
    $region36: #{tpu_custom_call.1} parent=5 // pred_fallthru
      _
    %p550 = scmp.le.s32.totalorder 2, %s10
    // Predicated region
    $region41: #{tpu_custom_call.1} parent=5 // pred_check
      %p551 = pneg %p550
    $region42: #{tpu_custom_call.1} parent=5 // pred_check_branch
      %553 = sbr.rel (%p551) target = $region44
    $region43: #{tpu_custom_call.1} parent=5 // pred_region
      %s554 = ssub.s32 %s10, 2
      // Predicated region
      $region45: #{tpu_custom_call.1} parent=43 // pred_check
        %p555 = pneg %p155
      $region46: #{tpu_custom_call.1} parent=43 // pred_check_branch
        %557 = sbr.rel (%p555) target = $region48
      $region47: #{tpu_custom_call.1} parent=43 // pred_region
        %s558 = smul.u32 4, %s22
        %p559 = scmp.lt.s32.totalorder %s21, 1
        %s560 = scalar_select %p559, %s21, 1
        %p561 = scmp.lt.s32.totalorder %s558, 7
        %s562 = scalar_select %p561, %s558, 7
        %s563 = smul.addr %s560, 8
        %s564 = sadd.s32 %s562, %s563
        %s565 = smul.addr %s564, 8
        %s566 = scalar_lea.vmem %s4, %s565
      $region48: #{tpu_custom_call.1} parent=43 // pred_fallthru
        _
    $region44: #{tpu_custom_call.1} parent=5 // pred_fallthru
      _
  $region6: #{tpu_custom_call.1} parent=0 // loop_footer
    %s14 = sadd.s32 1, %s10
  $region7: #{tpu_custom_call.1} parent=0 // loop_footer_branch
    %9 = sbr.rel target = $region3
  $region8: #{tpu_custom_call.1} parent=0 // loop_exit
    _

</llo_original>
